<compile_context>
chip_gen: v5e
topology: v5e:2x2
jax: 0.10.0
libtpu: 0.0.40
codegen_flags: <defaults>
</compile_context>

<pallas_src>
import functools

import jax
import jax.numpy as jnp
from jax.experimental import pallas as pl
from jax.experimental.pallas import tpu as pltpu


def _round_up(x: int, m: int) -> int:
    return (x + m - 1) // m * m


def _critic_decoder_kernel(
    x_ref, cost_ref,
    wg_ref, wn_ref, wc_ref, bg_ref, bn_ref, bc_ref,
    w1m_ref, w1x_ref, w1c_ref, b1_ref, w2_ref, b2_ref, w3_ref, b3_ref,
    out_ref,
    sum_sc, max_sc,
    *, n_total: int, inv_n: float,
):
    j = pl.program_id(1)                      # node-tile index (reduction axis)
    nj = pl.num_programs(1)

    @pl.when(j == 0)
    def _init():
        sum_sc[...] = jnp.zeros_like(sum_sc)
        max_sc[...] = jnp.full_like(max_sc, -jnp.inf)

    x = x_ref[...]                            # (tb, tn, D), caller dtype
    tb, tn, D = x.shape
    Hp = wn_ref.shape[1]

    # Mask the ragged last node tile (static check: only traced if N % tn != 0).
    if n_total % tn != 0:
        node_ids = jax.lax.broadcasted_iota(jnp.int32, (1, tn, 1), 1) + j * tn
        valid = node_ids < n_total            # (1, tn, 1)
        x = jnp.where(valid, x, jnp.zeros_like(x))
    else:
        valid = None

    # Mean path: accumulate sum_n(x) in f32 (no full f32 copy of the block).
    sum_sc[...] += jnp.sum(x, axis=1, dtype=jnp.float32)

    # Max path: node projection as one flat MXU matmul, then reduce over the tile.
    xb = x.astype(jnp.bfloat16)
    wn = wn_ref[...]                          # (D, Hp) bf16
    if tn % 8 == 0:
        node = jnp.dot(xb.reshape(tb * tn, D), wn,
                       preferred_element_type=jnp.float32).reshape(tb, tn, Hp)
        if valid is not None:
            node = jnp.where(valid, node, -jnp.inf)
        tile_max = jnp.max(node, axis=1)      # (tb, Hp)
    else:
        # Tiny-N fallback (tn == N < 8): unrolled per-node matmuls, no (tb,tn,Hp) temp.
        tile_max = None
        for n in range(tn):
            m = jnp.dot(xb[:, n, :], wn, preferred_element_type=jnp.float32)
            tile_max = m if tile_max is None else jnp.maximum(tile_max, m)
    max_sc[...] = jnp.maximum(max_sc[...], tile_max)

    @pl.when(j == nj - 1)
    def _finalize():
        # Pooled features (tiny matmuls kept in f32 for parity with the reference).
        mean_pool = sum_sc[...] * inv_n                                   # (tb, D)
        graph = jnp.dot(mean_pool, wg_ref[...],
                        preferred_element_type=jnp.float32) + bg_ref[...]
        f_mean = jnp.dot(mean_pool, wc_ref[...],
                         preferred_element_type=jnp.float32) + bc_ref[...]
        f_max = max_sc[...] + bn_ref[...] + graph                         # (tb, Hp)

        # MLP head: concat([mean, max, cost]) folded into W1 row blocks; bf16 MXU.
        cost = cost_ref[...]                                              # (tb, 1)
        h1 = (jnp.dot(f_mean.astype(jnp.bfloat16), w1m_ref[...],
                      preferred_element_type=jnp.float32)
              + jnp.dot(f_max.astype(jnp.bfloat16), w1x_ref[...],
                        preferred_element_type=jnp.float32)
              + cost * w1c_ref[...]
              + b1_ref[...])                                              # (tb, Dp)
        h1 = jnp.maximum(h1, 0.0)   # ReLU; Dropout(0.01) identity at inference
        h2 = jnp.maximum(
            jnp.dot(h1.astype(jnp.bfloat16), w2_ref[...],
                    preferred_element_type=jnp.float32) + b2_ref[...],
            0.0)                                                          # (tb, Hp)
        out_ref[...] = (jnp.dot(h2, w3_ref[...],
                                preferred_element_type=jnp.float32) + b3_ref[...])


def critic_decoder(x, best_cost, params, *, tb=None, tn=None):
    """x: (B, N, D), best_cost: (B, 1) -> (B, 1) float32."""
    B, N, D = (int(s) for s in x.shape)
    H = D // 2
    Hp = _round_up(max(H, 1), 128)   # lane-pad hidden width
    Dp = _round_up(D, 128)           # lane-pad MLP width

    f32, bf16 = jnp.float32, jnp.bfloat16

    def padc(a, cols):   # zero-pad last dim
        return jnp.pad(a, ((0, 0), (0, cols - a.shape[1])))

    def padr(a, rows):   # zero-pad first dim
        return jnp.pad(a, ((0, rows - a.shape[0]), (0, 0)))

    wg = params["wg"].astype(f32)
    wn = params["wn"].astype(f32)
    bg = params["bg"].astype(f32)
    bn = params["bn"].astype(f32)

    # Projection weights: node/max path bf16 (dominant matmul); graph/mean path f32.
    wn_p = padc(wn, Hp).astype(bf16)                      # (D, Hp)
    wg_p = padc(wg, Hp)                                   # (D, Hp)
    wc_p = padc(wg + wn, Hp)                              # (D, Hp): folded mean path
    bg_p = padc(bg, Hp)                                   # (1, Hp)
    bn_p = padc(bn, Hp)                                   # (1, Hp)
    bc_p = padc(bg + bn, Hp)                              # (1, Hp)

    # MLP head, first layer split into [mean | max | cost] row blocks (bf16 MXU).
    w1 = params["w1"].astype(f32)                         # (D + 1, D)
    w1m = padr(padc(w1[:H], Dp), Hp).astype(bf16)         # (Hp, Dp)
    w1x = padr(padc(w1[H:2 * H], Dp), Hp).astype(bf16)    # (Hp, Dp)
    w1c = padc(w1[2 * H:2 * H + 1], Dp)                   # (1, Dp)
    b1 = padc(params["b1"].astype(f32), Dp)               # (1, Dp)
    w2 = padr(padc(params["w2"].astype(f32), Hp), Dp).astype(bf16)  # (Dp, Hp)
    b2 = padc(params["b2"].astype(f32), Hp)               # (1, Hp)
    w3 = padr(params["w3"].astype(f32), Hp)               # (Hp, 1)
    b3 = params["b3"].astype(f32)                         # (1, 1)

    weights = (wg_p, wn_p, wc_p, bg_p, bn_p, bc_p,
               w1m, w1x, w1c, b1, w2, b2, w3, b3)
    weight_bytes = sum(int(w.size) * w.dtype.itemsize for w in weights)

    # ---- per-generation VMEM budget + tile selection ------------------------
    try:
        vmem_cap = int(pltpu.get_tpu_info().vmem_capacity_bytes)
    except Exception:
        vmem_cap = 64 * 1024 * 1024           # conservative (v7x-sized)
    budget = int(vmem_cap * 0.40)
    x_item = jnp.dtype(x.dtype).itemsize

    def vmem_cost(tb_, tn_):
        return (2 * tb_ * tn_ * D * x_item          # double-buffered x block
                + tb_ * tn_ * (2 * D + 4 * Hp)      # bf16 cast + f32 node projection
                + 4 * tb_ * (D + 6 * Hp + 2 * Dp)   # accumulators + head temporaries
                + weight_bytes)                     # single-buffered constants

    # Node-tile length: multiple of 8 (or the full N when N < 8).
    if tn is None:
        if N < 8:
            tn = N
        else:
            tn = min(N if N % 8 == 0 else (N // 8) * 8, 1024)
            while tn > 8 and vmem_cost(8, tn) > budget:
                tn = max(8, (tn // 2) // 8 * 8)
    else:
        tn = N if (N < 8 or (tn >= N and N % 8 == 0)) \
            else max(8, (min(tn, N) // 8) * 8)

    # Batch-tile length.
    if tb is None:
        tb = min(256, _round_up(B, 8))
        while tb > 8 and vmem_cost(tb, tn) > budget:
            tb //= 2
    if tb >= B:
        # Keep >= 2 batch tiles when possible so the "parallel" axis can shard
        # across both TensorCores on v7x; otherwise a single full-B tile.
        tb = _round_up((B + 1) // 2, 8) if B >= 16 else B
    else:
        tb = max(8, (tb // 8) * 8)

    grid = (pl.cdiv(B, tb), pl.cdiv(N, tn))
    est = vmem_cost(tb, tn)
    vmem_limit = int(min(vmem_cap * 0.70, max(32 * 1024 * 1024, 2 * est)))

    cost = best_cost.astype(f32).reshape(B, 1)

    def const_spec(a):
        nd = a.ndim
        # Constant block revisited every step -> single VMEM buffer is enough.
        return pl.BlockSpec(a.shape, lambda i, j, _nd=nd: (0,) * _nd,
                            pipeline_mode=pl.Buffered(1))

    in_specs = [
        pl.BlockSpec((tb, tn, D), lambda i, j: (i, j, 0)),   # x tile (no wrapper pad/cast)
        pl.BlockSpec((tb, 1), lambda i, j: (i, 0)),          # best_cost tile
    ] + [const_spec(w) for w in weights]

    kernel = functools.partial(_critic_decoder_kernel,
                               n_total=N, inv_n=1.0 / float(N))

    out = pl.pallas_call(
        kernel,
        out_shape=jax.ShapeDtypeStruct((B, 1), jnp.float32),
        grid_spec=pltpu.PrefetchScalarGridSpec(
            num_scalar_prefetch=0,
            grid=grid,
            in_specs=in_specs,
            out_specs=pl.BlockSpec((tb, 1), lambda i, j: (i, 0)),
            scratch_shapes=[pltpu.VMEM((tb, D), jnp.float32),    # running sum_n(x)
                            pltpu.VMEM((tb, Hp), jnp.float32)],  # running max_n(x@Wn)
        ),
        compiler_params=pltpu.CompilerParams(
            dimension_semantics=("parallel", "arbitrary"),
            vmem_limit_bytes=vmem_limit,
        ),
    )(x, cost, *weights)
    return out


def init_params(key, input_dim):
    """Deterministic synthetic parameters, PyTorch-Linear-like uniform init.

    Weights stored as (in_features, out_features); biases as (1, out_features).
    """
    D = input_dim
    H = D // 2

    def linear(k, fan_in, fan_out):
        kw, kb = jax.random.split(k)
        bound = 1.0 / float(fan_in) ** 0.5
        w = jax.random.uniform(kw, (fan_in, fan_out), jnp.float32, -bound, bound)
        b = jax.random.uniform(kb, (1, fan_out), jnp.float32, -bound, bound)
        return w, b

    keys = jax.random.split(key, 5)
    wg, bg = linear(keys[0], D, H)          # project_graph
    wn, bn = linear(keys[1], D, H)          # project_node
    w1, b1 = linear(keys[2], D + 1, D)      # MLP layer 1
    w2, b2 = linear(keys[3], D, H)          # MLP layer 2
    w3, b3 = linear(keys[4], H, 1)          # MLP output layer
    return dict(wg=wg, bg=bg, wn=wn, bn=bn,
                w1=w1, b1=b1, w2=w2, b2=b2, w3=w3, b3=b3)


def critic_decoder_ref(x, best_cost, params):
    """Plain-JAX reference mirroring the PyTorch forward (eval mode, f32)."""
    mean_pool = x.mean(axis=1)                                    # (B, D)
    graph = mean_pool @ params["wg"] + params["bg"]               # (B, H)
    node = x @ params["wn"] + params["bn"]                        # (B, N, H)
    fusion = node + graph[:, None, :]
    feat = jnp.concatenate(
        [fusion.mean(axis=1), fusion.max(axis=1), best_cost], axis=-1)  # (B, D+1)
    h1 = jnp.maximum(feat @ params["w1"] + params["b1"], 0.0)
    h2 = jnp.maximum(h1 @ params["w2"] + params["b2"], 0.0)
    return h2 @ params["w3"] + params["b3"]                       # (B, 1)


if __name__ == "__main__":
    B, N, D = 2, 8, 32   # batch, num_nodes, input_dim

    key = jax.random.PRNGKey(0)
    k_params, k_x, k_c = jax.random.split(key, 3)

    params = init_params(k_params, D)
    x = jax.random.normal(k_x, (B, N, D), jnp.float32)
    best_cost = jax.random.uniform(k_c, (B, 1), jnp.float32)

    value = jax.block_until_ready(critic_decoder(x, best_cost, params))
    value_ref = critic_decoder_ref(x, best_cost, params)
    assert value.shape == (B, 1), value.shape
    # bf16 node projection / MLP head -> relaxed tolerance vs the f32 reference.
    assert jnp.allclose(value, value_ref, rtol=2e-2, atol=2e-2), (value, value_ref)

    # Multi-tile batch grid with an unpadded, partial last batch tile.
    B2 = 20
    k_x2, k_c2 = jax.random.split(jax.random.PRNGKey(1))
    x2 = jax.random.normal(k_x2, (B2, N, D), jnp.float32)
    c2 = jax.random.uniform(k_c2, (B2, 1), jnp.float32)
    v2 = jax.block_until_ready(critic_decoder(x2, c2, params, tb=8))
    v2_ref = critic_decoder_ref(x2, c2, params)
    assert v2.shape == (B2, 1), v2.shape
    assert jnp.allclose(v2, v2_ref, rtol=2e-2, atol=2e-2), (v2, v2_ref)

    # Multi-tile node (N) grid with a ragged last tile: exercises the
    # running-sum/max accumulators + masking path used to bound VMEM at large N.
    B3, N3 = 4, 20
    k_x3, k_c3 = jax.random.split(jax.random.PRNGKey(2))
    x3 = jax.random.normal(k_x3, (B3, N3, D), jnp.float32)
    c3 = jax.random.uniform(k_c3, (B3, 1), jnp.float32)
    v3 = jax.block_until_ready(critic_decoder(x3, c3, params, tn=8))
    v3_ref = critic_decoder_ref(x3, c3, params)
    assert v3.shape == (B3, 1), v3.shape
    assert jnp.allclose(v3, v3_ref, rtol=2e-2, atol=2e-2), (v3, v3_ref)

    print("KERNEL_OK")
</pallas_src>

<mosaic_0001>
module attributes {stable_mosaic.version = 11 : i64} {
  func.func @_critic_decoder_kernel(%arg0: i32, %arg1: i32, %arg2: memref<2x8x32xf32, #tpu.memory_space<vmem>>, %arg3: memref<2x1xf32, #tpu.memory_space<vmem>>, %arg4: memref<32x128xf32, #tpu.memory_space<vmem>>, %arg5: memref<32x128xbf16, #tpu.memory_space<vmem>>, %arg6: memref<32x128xf32, #tpu.memory_space<vmem>>, %arg7: memref<1x128xf32, #tpu.memory_space<vmem>>, %arg8: memref<1x128xf32, #tpu.memory_space<vmem>>, %arg9: memref<1x128xf32, #tpu.memory_space<vmem>>, %arg10: memref<128x128xbf16, #tpu.memory_space<vmem>>, %arg11: memref<128x128xbf16, #tpu.memory_space<vmem>>, %arg12: memref<1x128xf32, #tpu.memory_space<vmem>>, %arg13: memref<1x128xf32, #tpu.memory_space<vmem>>, %arg14: memref<128x128xbf16, #tpu.memory_space<vmem>>, %arg15: memref<1x128xf32, #tpu.memory_space<vmem>>, %arg16: memref<128x1xf32, #tpu.memory_space<vmem>>, %arg17: memref<1x1xf32, #tpu.memory_space<vmem>>, %arg18: memref<2x1xf32, #tpu.memory_space<vmem>>, %arg19: memref<2x32xf32, #tpu.memory_space<vmem>>, %arg20: memref<2x128xf32, #tpu.memory_space<vmem>>) attributes {dimension_semantics = [#tpu.dimension_semantics<parallel>, #tpu.dimension_semantics<arbitrary>], iteration_bounds = array<i64: 1, 1>, scalar_prefetch = 0 : i64, scratch_operands = 2 : i64, tpu.core_type = #tpu.core_type<tc>, window_params = [{transform_indices = @transform_0, window_bounds = array<i64: 2, 8, 32>}, {transform_indices = @transform_1, window_bounds = array<i64: 2, 1>}, {pipeline_mode = #tpu.pipeline_mode<synchronous>, transform_indices = @transform_2, window_bounds = array<i64: 32, 128>}, {pipeline_mode = #tpu.pipeline_mode<synchronous>, transform_indices = @transform_3, window_bounds = array<i64: 32, 128>}, {pipeline_mode = #tpu.pipeline_mode<synchronous>, transform_indices = @transform_4, window_bounds = array<i64: 32, 128>}, {pipeline_mode = #tpu.pipeline_mode<synchronous>, transform_indices = @transform_5, window_bounds = array<i64: 1, 128>}, {pipeline_mode = #tpu.pipeline_mode<synchronous>, transform_indices = @transform_6, window_bounds = array<i64: 1, 128>}, {pipeline_mode = #tpu.pipeline_mode<synchronous>, transform_indices = @transform_7, window_bounds = array<i64: 1, 128>}, {pipeline_mode = #tpu.pipeline_mode<synchronous>, transform_indices = @transform_8, window_bounds = array<i64: 128, 128>}, {pipeline_mode = #tpu.pipeline_mode<synchronous>, transform_indices = @transform_9, window_bounds = array<i64: 128, 128>}, {pipeline_mode = #tpu.pipeline_mode<synchronous>, transform_indices = @transform_10, window_bounds = array<i64: 1, 128>}, {pipeline_mode = #tpu.pipeline_mode<synchronous>, transform_indices = @transform_11, window_bounds = array<i64: 1, 128>}, {pipeline_mode = #tpu.pipeline_mode<synchronous>, transform_indices = @transform_12, window_bounds = array<i64: 128, 128>}, {pipeline_mode = #tpu.pipeline_mode<synchronous>, transform_indices = @transform_13, window_bounds = array<i64: 1, 128>}, {pipeline_mode = #tpu.pipeline_mode<synchronous>, transform_indices = @transform_14, window_bounds = array<i64: 128, 1>}, {pipeline_mode = #tpu.pipeline_mode<synchronous>, transform_indices = @transform_15, window_bounds = array<i64: 1, 1>}, {transform_indices = @transform_16, window_bounds = array<i64: 2, 1>}]} {
    %c0_i32 = arith.constant 0 : i32
    %0 = arith.cmpi eq, %arg1, %c0_i32 : i32
    %1 = arith.extui %0 : i1 to i32
    %c0_i32_0 = arith.constant 0 : i32
    %2 = arith.cmpi ne, %1, %c0_i32_0 : i32
    scf.if %2 {
      %cst_17 = arith.constant 0.000000e+00 : f32
      %20 = vector.broadcast %cst_17 : f32 to vector<2x32xf32>
      %c0_18 = arith.constant 0 : index
      %c0_19 = arith.constant 0 : index
      %21 = vector.load %arg19[%c0_18, %c0_19] : memref<2x32xf32, #tpu.memory_space<vmem>>, vector<2x32xf32>
      tpu.vector_store %arg19[%c0_18, %c0_19], %20 {strides = array<i32>} : memref<2x32xf32, #tpu.memory_space<vmem>>, vector<2x32xf32>,
      %cst_20 = arith.constant 0xFF800000 : f32
      %22 = vector.broadcast %cst_20 : f32 to vector<2x128xf32>
      %c0_21 = arith.constant 0 : index
      %c0_22 = arith.constant 0 : index
      %23 = vector.load %arg20[%c0_21, %c0_22] : memref<2x128xf32, #tpu.memory_space<vmem>>, vector<2x128xf32>
      tpu.vector_store %arg20[%c0_21, %c0_22], %22 {strides = array<i32>} : memref<2x128xf32, #tpu.memory_space<vmem>>, vector<2x128xf32>,
    } else {
    }
    %c0 = arith.constant 0 : index
    %c0_1 = arith.constant 0 : index
    %c0_2 = arith.constant 0 : index
    %3 = vector.load %arg2[%c0, %c0_1, %c0_2] : memref<2x8x32xf32, #tpu.memory_space<vmem>>, vector<2x8x32xf32>
    %c0_3 = arith.constant 0 : index
    %c0_4 = arith.constant 0 : index
    %4 = vector.load %arg19[%c0_3, %c0_4] : memref<2x32xf32, #tpu.memory_space<vmem>>, vector<2x32xf32>
    %cst = arith.constant dense<0.000000e+00> : vector<2x32xf32>
    %5 = vector.multi_reduction <add>, %3, %cst [1] : vector<2x8x32xf32> to vector<2x32xf32>
    %6 = arith.addf %4, %5 : vector<2x32xf32>
    %c0_5 = arith.constant 0 : index
    %c0_6 = arith.constant 0 : index
    %7 = vector.load %arg19[%c0_5, %c0_6] : memref<2x32xf32, #tpu.memory_space<vmem>>, vector<2x32xf32>
    tpu.vector_store %arg19[%c0_5, %c0_6], %6 {strides = array<i32>} : memref<2x32xf32, #tpu.memory_space<vmem>>, vector<2x32xf32>,
    %8 = arith.truncf %3 : vector<2x8x32xf32> to vector<2x8x32xbf16>
    %c0_7 = arith.constant 0 : index
    %c0_8 = arith.constant 0 : index
    %9 = vector.load %arg5[%c0_7, %c0_8] : memref<32x128xbf16, #tpu.memory_space<vmem>>, vector<32x128xbf16>
    %10 = vector.shape_cast %8 : vector<2x8x32xbf16> to vector<16x32xbf16>
    %cst_9 = arith.constant dense<0.000000e+00> : vector<16x128xf32>
    %11 = tpu.matmul %10, %9, %cst_9 {dimension_numbers = #tpu.dot_dimension_numbers<[1], [0], [0], [1], [0, 0, 1, 1], [], []>} : vector<16x32xbf16>, vector<32x128xbf16>, vector<16x128xf32> -> vector<16x128xf32>
    %12 = vector.shape_cast %11 : vector<16x128xf32> to vector<2x8x128xf32>
    %cst_10 = arith.constant dense<0xFF800000> : vector<2x128xf32>
    %13 = vector.multi_reduction <maximumf>, %12, %cst_10 [1] : vector<2x8x128xf32> to vector<2x128xf32>
    %c0_11 = arith.constant 0 : index
    %c0_12 = arith.constant 0 : index
    %14 = vector.load %arg20[%c0_11, %c0_12] : memref<2x128xf32, #tpu.memory_space<vmem>>, vector<2x128xf32>
    %15 = arith.maximumf %14, %13 : vector<2x128xf32>
    %c0_13 = arith.constant 0 : index
    %c0_14 = arith.constant 0 : index
    %16 = vector.load %arg20[%c0_13, %c0_14] : memref<2x128xf32, #tpu.memory_space<vmem>>, vector<2x128xf32>
    tpu.vector_store %arg20[%c0_13, %c0_14], %15 {strides = array<i32>} : memref<2x128xf32, #tpu.memory_space<vmem>>, vector<2x128xf32>,
    %c0_i32_15 = arith.constant 0 : i32
    %17 = arith.cmpi eq, %arg1, %c0_i32_15 : i32
    %18 = arith.extui %17 : i1 to i32
    %c0_i32_16 = arith.constant 0 : i32
    %19 = arith.cmpi ne, %18, %c0_i32_16 : i32
    scf.if %19 {
      %c0_17 = arith.constant 0 : index
      %c0_18 = arith.constant 0 : index
      %20 = vector.load %arg19[%c0_17, %c0_18] : memref<2x32xf32, #tpu.memory_space<vmem>>, vector<2x32xf32>
      %cst_19 = arith.constant 1.250000e-01 : f32
      %21 = vector.broadcast %cst_19 : f32 to vector<2x32xf32>
      %22 = arith.mulf %20, %21 : vector<2x32xf32>
      %c0_20 = arith.constant 0 : index
      %c0_21 = arith.constant 0 : index
      %23 = vector.load %arg4[%c0_20, %c0_21] : memref<32x128xf32, #tpu.memory_space<vmem>>, vector<32x128xf32>
      %cst_22 = arith.constant dense<0.000000e+00> : vector<2x128xf32>
      %24 = tpu.matmul %22, %23, %cst_22 {dimension_numbers = #tpu.dot_dimension_numbers<[1], [0], [0], [1], [0, 0, 1, 1], [], []>} : vector<2x32xf32>, vector<32x128xf32>, vector<2x128xf32> -> vector<2x128xf32>
      %c0_23 = arith.constant 0 : index
      %c0_24 = arith.constant 0 : index
      %25 = vector.load %arg7[%c0_23, %c0_24] : memref<1x128xf32, #tpu.memory_space<vmem>>, vector<1x128xf32>
      %26 = vector.broadcast %25 : vector<1x128xf32> to vector<2x128xf32>
      %27 = arith.addf %24, %26 : vector<2x128xf32>
      %c0_25 = arith.constant 0 : index
      %c0_26 = arith.constant 0 : index
      %28 = vector.load %arg6[%c0_25, %c0_26] : memref<32x128xf32, #tpu.memory_space<vmem>>, vector<32x128xf32>
      %cst_27 = arith.constant dense<0.000000e+00> : vector<2x128xf32>
      %29 = tpu.matmul %22, %28, %cst_27 {dimension_numbers = #tpu.dot_dimension_numbers<[1], [0], [0], [1], [0, 0, 1, 1], [], []>} : vector<2x32xf32>, vector<32x128xf32>, vector<2x128xf32> -> vector<2x128xf32>
      %c0_28 = arith.constant 0 : index
      %c0_29 = arith.constant 0 : index
      %30 = vector.load %arg9[%c0_28, %c0_29] : memref<1x128xf32, #tpu.memory_space<vmem>>, vector<1x128xf32>
      %31 = vector.broadcast %30 : vector<1x128xf32> to vector<2x128xf32>
      %32 = arith.addf %29, %31 : vector<2x128xf32>
      %c0_30 = arith.constant 0 : index
      %c0_31 = arith.constant 0 : index
      %33 = vector.load %arg20[%c0_30, %c0_31] : memref<2x128xf32, #tpu.memory_space<vmem>>, vector<2x128xf32>
      %c0_32 = arith.constant 0 : index
      %c0_33 = arith.constant 0 : index
      %34 = vector.load %arg8[%c0_32, %c0_33] : memref<1x128xf32, #tpu.memory_space<vmem>>, vector<1x128xf32>
      %35 = vector.broadcast %34 : vector<1x128xf32> to vector<2x128xf32>
      %36 = arith.addf %33, %35 : vector<2x128xf32>
      %37 = arith.addf %36, %27 : vector<2x128xf32>
      %c0_34 = arith.constant 0 : index
      %c0_35 = arith.constant 0 : index
      %38 = vector.load %arg3[%c0_34, %c0_35] : memref<2x1xf32, #tpu.memory_space<vmem>>, vector<2x1xf32>
      %39 = arith.truncf %32 : vector<2x128xf32> to vector<2x128xbf16>
      %c0_36 = arith.constant 0 : index
      %c0_37 = arith.constant 0 : index
      %40 = vector.load %arg10[%c0_36, %c0_37] : memref<128x128xbf16, #tpu.memory_space<vmem>>, vector<128x128xbf16>
      %cst_38 = arith.constant dense<0.000000e+00> : vector<2x128xf32>
      %41 = tpu.matmul %39, %40, %cst_38 {dimension_numbers = #tpu.dot_dimension_numbers<[1], [0], [0], [1], [0, 0, 1, 1], [], []>} : vector<2x128xbf16>, vector<128x128xbf16>, vector<2x128xf32> -> vector<2x128xf32>
      %42 = arith.truncf %37 : vector<2x128xf32> to vector<2x128xbf16>
      %c0_39 = arith.constant 0 : index
      %c0_40 = arith.constant 0 : index
      %43 = vector.load %arg11[%c0_39, %c0_40] : memref<128x128xbf16, #tpu.memory_space<vmem>>, vector<128x128xbf16>
      %cst_41 = arith.constant dense<0.000000e+00> : vector<2x128xf32>
      %44 = tpu.matmul %42, %43, %cst_41 {dimension_numbers = #tpu.dot_dimension_numbers<[1], [0], [0], [1], [0, 0, 1, 1], [], []>} : vector<2x128xbf16>, vector<128x128xbf16>, vector<2x128xf32> -> vector<2x128xf32>
      %45 = arith.addf %41, %44 : vector<2x128xf32>
      %c0_42 = arith.constant 0 : index
      %c0_43 = arith.constant 0 : index
      %46 = vector.load %arg12[%c0_42, %c0_43] : memref<1x128xf32, #tpu.memory_space<vmem>>, vector<1x128xf32>
      %47 = vector.broadcast %38 : vector<2x1xf32> to vector<2x128xf32>
      %48 = vector.broadcast %46 : vector<1x128xf32> to vector<2x128xf32>
      %49 = arith.mulf %47, %48 : vector<2x128xf32>
      %50 = arith.addf %45, %49 : vector<2x128xf32>
      %c0_44 = arith.constant 0 : index
      %c0_45 = arith.constant 0 : index
      %51 = vector.load %arg13[%c0_44, %c0_45] : memref<1x128xf32, #tpu.memory_space<vmem>>, vector<1x128xf32>
      %52 = vector.broadcast %51 : vector<1x128xf32> to vector<2x128xf32>
      %53 = arith.addf %50, %52 : vector<2x128xf32>
      %cst_46 = arith.constant 0.000000e+00 : f32
      %54 = vector.broadcast %cst_46 : f32 to vector<2x128xf32>
      %55 = arith.maximumf %53, %54 : vector<2x128xf32>
      %56 = arith.truncf %55 : vector<2x128xf32> to vector<2x128xbf16>
      %c0_47 = arith.constant 0 : index
      %c0_48 = arith.constant 0 : index
      %57 = vector.load %arg14[%c0_47, %c0_48] : memref<128x128xbf16, #tpu.memory_space<vmem>>, vector<128x128xbf16>
      %cst_49 = arith.constant dense<0.000000e+00> : vector<2x128xf32>
      %58 = tpu.matmul %56, %57, %cst_49 {dimension_numbers = #tpu.dot_dimension_numbers<[1], [0], [0], [1], [0, 0, 1, 1], [], []>} : vector<2x128xbf16>, vector<128x128xbf16>, vector<2x128xf32> -> vector<2x128xf32>
      %c0_50 = arith.constant 0 : index
      %c0_51 = arith.constant 0 : index
      %59 = vector.load %arg15[%c0_50, %c0_51] : memref<1x128xf32, #tpu.memory_space<vmem>>, vector<1x128xf32>
      %60 = vector.broadcast %59 : vector<1x128xf32> to vector<2x128xf32>
      %61 = arith.addf %58, %60 : vector<2x128xf32>
      %cst_52 = arith.constant 0.000000e+00 : f32
      %62 = vector.broadcast %cst_52 : f32 to vector<2x128xf32>
      %63 = arith.maximumf %61, %62 : vector<2x128xf32>
      %c0_53 = arith.constant 0 : index
      %c0_54 = arith.constant 0 : index
      %64 = vector.load %arg16[%c0_53, %c0_54] : memref<128x1xf32, #tpu.memory_space<vmem>>, vector<128x1xf32>
      %cst_55 = arith.constant dense<0.000000e+00> : vector<2x1xf32>
      %65 = tpu.matmul %63, %64, %cst_55 {dimension_numbers = #tpu.dot_dimension_numbers<[1], [0], [0], [1], [0, 0, 1, 1], [], []>} : vector<2x128xf32>, vector<128x1xf32>, vector<2x1xf32> -> vector<2x1xf32>
      %c0_56 = arith.constant 0 : index
      %c0_57 = arith.constant 0 : index
      %66 = vector.load %arg17[%c0_56, %c0_57] : memref<1x1xf32, #tpu.memory_space<vmem>>, vector<1x1xf32>
      %67 = vector.broadcast %66 : vector<1x1xf32> to vector<2x1xf32>
      %68 = arith.addf %65, %67 : vector<2x1xf32>
      %c0_58 = arith.constant 0 : index
      %c0_59 = arith.constant 0 : index
      %69 = vector.load %arg18[%c0_58, %c0_59] : memref<2x1xf32, #tpu.memory_space<vmem>>, vector<2x1xf32>
      tpu.vector_store %arg18[%c0_58, %c0_59], %68 {strides = array<i32>} : memref<2x1xf32, #tpu.memory_space<vmem>>, vector<2x1xf32>,
    } else {
    }
    return
  }
  func.func @transform_0(%arg0: i32, %arg1: i32) -> (i32, i32, i32) {
    %c0_i32 = arith.constant 0 : i32
    %c0_i32_0 = arith.constant 0 : i32
    return %arg0, %arg1, %c0_i32 : i32, i32, i32
  }
  func.func @transform_1(%arg0: i32, %arg1: i32) -> (i32, i32) {
    %c0_i32 = arith.constant 0 : i32
    %c0_i32_0 = arith.constant 0 : i32
    return %arg0, %c0_i32 : i32, i32
  }
  func.func @transform_2(%arg0: i32, %arg1: i32) -> (i32, i32) {
    %c0_i32 = arith.constant 0 : i32
    %c0_i32_0 = arith.constant 0 : i32
    %c0_i32_1 = arith.constant 0 : i32
    return %c0_i32, %c0_i32_0 : i32, i32
  }
  func.func @transform_3(%arg0: i32, %arg1: i32) -> (i32, i32) {
    %c0_i32 = arith.constant 0 : i32
    %c0_i32_0 = arith.constant 0 : i32
    %c0_i32_1 = arith.constant 0 : i32
    return %c0_i32, %c0_i32_0 : i32, i32
  }
  func.func @transform_4(%arg0: i32, %arg1: i32) -> (i32, i32) {
    %c0_i32 = arith.constant 0 : i32
    %c0_i32_0 = arith.constant 0 : i32
    %c0_i32_1 = arith.constant 0 : i32
    return %c0_i32, %c0_i32_0 : i32, i32
  }
  func.func @transform_5(%arg0: i32, %arg1: i32) -> (i32, i32) {
    %c0_i32 = arith.constant 0 : i32
    %c0_i32_0 = arith.constant 0 : i32
    %c0_i32_1 = arith.constant 0 : i32
    return %c0_i32, %c0_i32_0 : i32, i32
  }
  func.func @transform_6(%arg0: i32, %arg1: i32) -> (i32, i32) {
    %c0_i32 = arith.constant 0 : i32
    %c0_i32_0 = arith.constant 0 : i32
    %c0_i32_1 = arith.constant 0 : i32
    return %c0_i32, %c0_i32_0 : i32, i32
  }
  func.func @transform_7(%arg0: i32, %arg1: i32) -> (i32, i32) {
    %c0_i32 = arith.constant 0 : i32
    %c0_i32_0 = arith.constant 0 : i32
    %c0_i32_1 = arith.constant 0 : i32
    return %c0_i32, %c0_i32_0 : i32, i32
  }
  func.func @transform_8(%arg0: i32, %arg1: i32) -> (i32, i32) {
    %c0_i32 = arith.constant 0 : i32
    %c0_i32_0 = arith.constant 0 : i32
    %c0_i32_1 = arith.constant 0 : i32
    return %c0_i32, %c0_i32_0 : i32, i32
  }
  func.func @transform_9(%arg0: i32, %arg1: i32) -> (i32, i32) {
    %c0_i32 = arith.constant 0 : i32
    %c0_i32_0 = arith.constant 0 : i32
    %c0_i32_1 = arith.constant 0 : i32
    return %c0_i32, %c0_i32_0 : i32, i32
  }
  func.func @transform_10(%arg0: i32, %arg1: i32) -> (i32, i32) {
    %c0_i32 = arith.constant 0 : i32
    %c0_i32_0 = arith.constant 0 : i32
    %c0_i32_1 = arith.constant 0 : i32
    return %c0_i32, %c0_i32_0 : i32, i32
  }
  func.func @transform_11(%arg0: i32, %arg1: i32) -> (i32, i32) {
    %c0_i32 = arith.constant 0 : i32
    %c0_i32_0 = arith.constant 0 : i32
    %c0_i32_1 = arith.constant 0 : i32
    return %c0_i32, %c0_i32_0 : i32, i32
  }
  func.func @transform_12(%arg0: i32, %arg1: i32) -> (i32, i32) {
    %c0_i32 = arith.constant 0 : i32
    %c0_i32_0 = arith.constant 0 : i32
    %c0_i32_1 = arith.constant 0 : i32
    return %c0_i32, %c0_i32_0 : i32, i32
  }
  func.func @transform_13(%arg0: i32, %arg1: i32) -> (i32, i32) {
    %c0_i32 = arith.constant 0 : i32
    %c0_i32_0 = arith.constant 0 : i32
    %c0_i32_1 = arith.constant 0 : i32
    return %c0_i32, %c0_i32_0 : i32, i32
  }
  func.func @transform_14(%arg0: i32, %arg1: i32) -> (i32, i32) {
    %c0_i32 = arith.constant 0 : i32
    %c0_i32_0 = arith.constant 0 : i32
    %c0_i32_1 = arith.constant 0 : i32
    return %c0_i32, %c0_i32_0 : i32, i32
  }
  func.func @transform_15(%arg0: i32, %arg1: i32) -> (i32, i32) {
    %c0_i32 = arith.constant 0 : i32
    %c0_i32_0 = arith.constant 0 : i32
    %c0_i32_1 = arith.constant 0 : i32
    return %c0_i32, %c0_i32_0 : i32, i32
  }
  func.func @transform_16(%arg0: i32, %arg1: i32) -> (i32, i32) {
    %c0_i32 = arith.constant 0 : i32
    %c0_i32_0 = arith.constant 0 : i32
    return %arg0, %c0_i32 : i32, i32
  }
}

</mosaic_0001>

<llo_original>
// kernel: tpu_custom_call.1
$region0: #{tpu_custom_call.1}
  #allocation0 [shape = 'u32[]', space=smem, size = 0x4, offset = 0x4, fixed_abs, tag = 'smem constant byte address 0x4 - core index']
  #allocation1 [shape = 'u32[72,128]{1,0:T(1,128)}', space=vmem, size = 0x9000, scoped, tag = 'internal scratch']
  #allocation2 [shape = 'f32[2,32]{1,0:T(2,128)}', space=vmem, size = 0x400, scoped, tag = 'scratch operand']
  #allocation3 [shape = 'f32[2,128]{1,0:T(2,128)}', space=vmem, size = 0x400, scoped, tag = 'scratch operand']
  #allocation4 [shape = 'f32[1,1]{1,0:T(1,128)S(1)}', space=vmem, size = 0x200, scoped, tag = 'scoped memory for tpu_custom_call.1']
  %s0 = inlined_call_operand.hbm [shape: f32[2,8,32], index: 0, kind: input, shape index: {}]
  %s1 = inlined_call_operand.vmem [shape: f32[2,1], index: 1, kind: input, shape index: {}]
  %s2 = inlined_call_operand.hbm [shape: f32[32,128], index: 2, kind: input, shape index: {}]
  %s3 = inlined_call_operand.hbm [shape: bf16[32,128], index: 3, kind: input, shape index: {}]
  %s4 = inlined_call_operand.hbm [shape: f32[32,128], index: 4, kind: input, shape index: {}]
  %s5 = inlined_call_operand.vmem [shape: f32[1,128], index: 5, kind: input, shape index: {}]
  %s6 = inlined_call_operand.vmem [shape: f32[1,128], index: 6, kind: input, shape index: {}]
  %s7 = inlined_call_operand.vmem [shape: f32[1,128], index: 7, kind: input, shape index: {}]
  %s8 = inlined_call_operand.vmem [shape: bf16[128,128], index: 8, kind: input, shape index: {}]
  %s9 = inlined_call_operand.vmem [shape: bf16[128,128], index: 9, kind: input, shape index: {}]
  %s10 = inlined_call_operand.vmem [shape: f32[1,128], index: 10, kind: input, shape index: {}]
  %s11 = inlined_call_operand.vmem [shape: f32[1,128], index: 11, kind: input, shape index: {}]
  %s12 = inlined_call_operand.hbm [shape: bf16[128,128], index: 12, kind: input, shape index: {}]
  %s13 = inlined_call_operand.vmem [shape: f32[1,128], index: 13, kind: input, shape index: {}]
  %s14 = inlined_call_operand.vmem [shape: f32[128,1], index: 14, kind: input, shape index: {}]
  %s15 = inlined_call_operand.<no memory space> [shape: f32[1,1], index: 15, kind: input, shape index: {}]
  %s16 = inlined_call_operand.vmem [shape: f32[2,1], index: 16, kind: output, shape index: {}]
  %s17 = sld [smem:[#allocation0]]
  $region102: #{tpu_custom_call.1} parent=0
    _
  %s19 = ssub.s32 1, %s17
  %s20 = scalar_select 0, %s19, %s17
  %v21 = vstv %s15
  %22 = vst [vmem:[#allocation4] sm:$0x1] %v21
  $region1: #{tpu_custom_call.1} parent=0
    #allocation5 [shape = 'u8[8192]{0}', space=vmem, size = 0x2000, scoped, tag = 'input window, operand 0, single buffered']
    #allocation6 [shape = 's32[1]{0}', space=sflag, size = 0x4, scoped, tag = 'scoped memory for tpu_custom_call.1']
    #allocation7 [shape = 'u8[16384]{0}', space=vmem, size = 0x4000, scoped, tag = 'input window, operand 2, single buffered']
    #allocation8 [shape = 's32[1]{0}', space=sflag, size = 0x4, scoped, tag = 'scoped memory for tpu_custom_call.1']
    #allocation9 [shape = 'u8[8192]{0}', space=vmem, size = 0x2000, scoped, tag = 'input window, operand 3, single buffered']
    #allocation10 [shape = 'u8[16384]{0}', space=vmem, size = 0x4000, scoped, tag = 'input window, operand 4, single buffered']
    #allocation11 [shape = 's32[1]{0}', space=sflag, size = 0x4, scoped, tag = 'scoped memory for tpu_custom_call.1']
    #allocation12 [shape = 'u8[32768]{0}', space=vmem, size = 0x8000, scoped, tag = 'input window, operand 12, single buffered']
    %23 = vsyncpa [#allocation6], 0
    %24 = vsyncpa [#allocation8], 0
    %25 = vsyncpa [#allocation11], 0
    // Predicated region
    $region2: #{tpu_custom_call.1} parent=1 // pred_check
      _
    $region3: #{tpu_custom_call.1} parent=1 // pred_check_branch
      %27 = sbr.rel (0) target = $region5
    $region4: #{tpu_custom_call.1} parent=1 // pred_region
      %29 = vsyncadd [#allocation6], 0
      %s30 = sshll.u32 %s0, 4
      %s31 = int_to_ptr.hbm [resolvable:$true] %s30
      %s32 = sshll.u32 [#allocation5], 4
      %s33 = int_to_ptr.vmem [resolvable:$true] %s32
      %38 = dma.hbm_to_vmem [thread:$0]  %s31, 256, %s33, [#allocation6], 128, 128, 8
    $region5: #{tpu_custom_call.1} parent=1 // pred_fallthru
      _
    // Predicated region
    $region6: #{tpu_custom_call.1} parent=1 // pred_check
      _
    $region7: #{tpu_custom_call.1} parent=1 // pred_check_branch
      %40 = sbr.rel (0) target = $region9
    $region8: #{tpu_custom_call.1} parent=1 // pred_region
      _
    $region9: #{tpu_custom_call.1} parent=1 // pred_fallthru
      _
    // Predicated region
    $region10: #{tpu_custom_call.1} parent=1 // pred_check
      _
    $region11: #{tpu_custom_call.1} parent=1 // pred_check_branch
      %42 = sbr.rel (0) target = $region13
    $region12: #{tpu_custom_call.1} parent=1 // pred_region
      %44 = vsyncadd [#allocation8], 0
      %s45 = sshll.u32 %s2, 4
      %s46 = int_to_ptr.hbm [resolvable:$true] %s45
      %s47 = sshll.u32 [#allocation7], 4
      %s48 = int_to_ptr.vmem [resolvable:$true] %s47
      %53 = dma.hbm_to_vmem [thread:$0]  %s46, 512, %s48, [#allocation8], 128, 128, 8
    $region13: #{tpu_custom_call.1} parent=1 // pred_fallthru
      _
    // Predicated region
    $region14: #{tpu_custom_call.1} parent=1 // pred_check
      _
    $region15: #{tpu_custom_call.1} parent=1 // pred_check_branch
      %55 = sbr.rel (0) target = $region17
    $region16: #{tpu_custom_call.1} parent=1 // pred_region
      %57 = vsyncadd [#allocation8], 0
      %s58 = sshll.u32 %s3, 4
      %s59 = int_to_ptr.hbm [resolvable:$true] %s58
      %s60 = sshll.u32 [#allocation9], 4
      %s61 = int_to_ptr.vmem [resolvable:$true] %s60
      %66 = dma.hbm_to_vmem [thread:$0]  %s59, 256, %s61, [#allocation8], 64, 64, 4
    $region17: #{tpu_custom_call.1} parent=1 // pred_fallthru
      _
    // Predicated region
    $region18: #{tpu_custom_call.1} parent=1 // pred_check
      _
    $region19: #{tpu_custom_call.1} parent=1 // pred_check_branch
      %68 = sbr.rel (0) target = $region21
    $region20: #{tpu_custom_call.1} parent=1 // pred_region
      %70 = vsyncadd [#allocation11], 0
      %s71 = sshll.u32 %s4, 4
      %s72 = int_to_ptr.hbm [resolvable:$true] %s71
      %s73 = sshll.u32 [#allocation10], 4
      %s74 = int_to_ptr.vmem [resolvable:$true] %s73
      %79 = dma.hbm_to_vmem [thread:$0]  %s72, 512, %s74, [#allocation11], 128, 128, 8
    $region21: #{tpu_custom_call.1} parent=1 // pred_fallthru
      _
    // Predicated region
    $region22: #{tpu_custom_call.1} parent=1 // pred_check
      _
    $region23: #{tpu_custom_call.1} parent=1 // pred_check_branch
      %81 = sbr.rel (0) target = $region25
    $region24: #{tpu_custom_call.1} parent=1 // pred_region
      _
    $region25: #{tpu_custom_call.1} parent=1 // pred_fallthru
      _
    // Predicated region
    $region26: #{tpu_custom_call.1} parent=1 // pred_check
      _
    $region27: #{tpu_custom_call.1} parent=1 // pred_check_branch
      %83 = sbr.rel (0) target = $region29
    $region28: #{tpu_custom_call.1} parent=1 // pred_region
      _
    $region29: #{tpu_custom_call.1} parent=1 // pred_fallthru
      _
    // Predicated region
    $region30: #{tpu_custom_call.1} parent=1 // pred_check
      _
    $region31: #{tpu_custom_call.1} parent=1 // pred_check_branch
      %85 = sbr.rel (0) target = $region33
    $region32: #{tpu_custom_call.1} parent=1 // pred_region
      _
    $region33: #{tpu_custom_call.1} parent=1 // pred_fallthru
      _
    // Predicated region
    $region34: #{tpu_custom_call.1} parent=1 // pred_check
      _
    $region35: #{tpu_custom_call.1} parent=1 // pred_check_branch
      %87 = sbr.rel (0) target = $region37
    $region36: #{tpu_custom_call.1} parent=1 // pred_region
      _
    $region37: #{tpu_custom_call.1} parent=1 // pred_fallthru
      _
    // Predicated region
    $region38: #{tpu_custom_call.1} parent=1 // pred_check
      _
    $region39: #{tpu_custom_call.1} parent=1 // pred_check_branch
      %89 = sbr.rel (0) target = $region41
    $region40: #{tpu_custom_call.1} parent=1 // pred_region
      _
    $region41: #{tpu_custom_call.1} parent=1 // pred_fallthru
      _
    // Predicated region
    $region42: #{tpu_custom_call.1} parent=1 // pred_check
      _
    $region43: #{tpu_custom_call.1} parent=1 // pred_check_branch
      %91 = sbr.rel (0) target = $region45
    $region44: #{tpu_custom_call.1} parent=1 // pred_region
      _
    $region45: #{tpu_custom_call.1} parent=1 // pred_fallthru
      _
    // Predicated region
    $region46: #{tpu_custom_call.1} parent=1 // pred_check
      _
    $region47: #{tpu_custom_call.1} parent=1 // pred_check_branch
      %93 = sbr.rel (0) target = $region49
    $region48: #{tpu_custom_call.1} parent=1 // pred_region
      _
    $region49: #{tpu_custom_call.1} parent=1 // pred_fallthru
      _
    // Predicated region
    $region50: #{tpu_custom_call.1} parent=1 // pred_check
      _
    $region51: #{tpu_custom_call.1} parent=1 // pred_check_branch
      %95 = sbr.rel (0) target = $region53
    $region52: #{tpu_custom_call.1} parent=1 // pred_region
      %97 = vsyncadd [#allocation11], 0
      %s98 = sshll.u32 %s12, 4
      %s99 = int_to_ptr.hbm [resolvable:$true] %s98
      %s100 = sshll.u32 [#allocation12], 4
      %s101 = int_to_ptr.vmem [resolvable:$true] %s100
      %106 = dma.hbm_to_vmem [thread:$0]  %s99, 1024, %s101, [#allocation11], 64, 64, 4
    $region53: #{tpu_custom_call.1} parent=1 // pred_fallthru
      _
    // Predicated region
    $region54: #{tpu_custom_call.1} parent=1 // pred_check
      _
    $region55: #{tpu_custom_call.1} parent=1 // pred_check_branch
      %108 = sbr.rel (0) target = $region57
    $region56: #{tpu_custom_call.1} parent=1 // pred_region
      _
    $region57: #{tpu_custom_call.1} parent=1 // pred_fallthru
      _
    // Predicated region
    $region58: #{tpu_custom_call.1} parent=1 // pred_check
      _
    $region59: #{tpu_custom_call.1} parent=1 // pred_check_branch
      %110 = sbr.rel (0) target = $region61
    $region60: #{tpu_custom_call.1} parent=1 // pred_region
      _
    $region61: #{tpu_custom_call.1} parent=1 // pred_fallthru
      _
    // Predicated region
    $region62: #{tpu_custom_call.1} parent=1 // pred_check
      _
    $region63: #{tpu_custom_call.1} parent=1 // pred_check_branch
      %112 = sbr.rel (0) target = $region65
    $region64: #{tpu_custom_call.1} parent=1 // pred_region
      _
    $region65: #{tpu_custom_call.1} parent=1 // pred_fallthru
      _
    // Predicated region
    $region66: #{tpu_custom_call.1} parent=1 // pred_check
      _
    $region67: #{tpu_custom_call.1} parent=1 // pred_check_branch
      %114 = sbr.rel (0) target = $region69
    $region68: #{tpu_custom_call.1} parent=1 // pred_region
      %116 = dma.done [#allocation6], 256
    $region69: #{tpu_custom_call.1} parent=1 // pred_fallthru
      _
    // Predicated region
    $region70: #{tpu_custom_call.1} parent=1 // pred_check
      _
    $region71: #{tpu_custom_call.1} parent=1 // pred_check_branch
      %118 = sbr.rel (0) target = $region73
    $region72: #{tpu_custom_call.1} parent=1 // pred_region
      %120 = dma.done [#allocation8], 512
    $region73: #{tpu_custom_call.1} parent=1 // pred_fallthru
      _
    // Predicated region
    $region74: #{tpu_custom_call.1} parent=1 // pred_check
      _
    $region75: #{tpu_custom_call.1} parent=1 // pred_check_branch
      %122 = sbr.rel (0) target = $region77
    $region76: #{tpu_custom_call.1} parent=1 // pred_region
      %124 = dma.done [#allocation8], 256
    $region77: #{tpu_custom_call.1} parent=1 // pred_fallthru
      _
    // Predicated region
    $region78: #{tpu_custom_call.1} parent=1 // pred_check
      _
    $region79: #{tpu_custom_call.1} parent=1 // pred_check_branch
      %126 = sbr.rel (0) target = $region81
    $region80: #{tpu_custom_call.1} parent=1 // pred_region
      %128 = dma.done [#allocation11], 512
    $region81: #{tpu_custom_call.1} parent=1 // pred_fallthru
      _
    // Predicated region
    $region82: #{tpu_custom_call.1} parent=1 // pred_check
      _
    $region83: #{tpu_custom_call.1} parent=1 // pred_check_branch
      %130 = sbr.rel (0) target = $region85
    $region84: #{tpu_custom_call.1} parent=1 // pred_region
      %132 = dma.done [#allocation11], 1024
    $region85: #{tpu_custom_call.1} parent=1 // pred_fallthru
      _
    %p134 = scmp.eq.s32.totalorder 0, 0
    // Predicated region
    $region86: #{tpu_custom_call.1} parent=1 // pred_check
      %p135 = pneg %p134
    $region87: #{tpu_custom_call.1} parent=1 // pred_check_branch
      %137 = sbr.rel (%p135) target = $region89
    $region88: #{tpu_custom_call.1} parent=1 // pred_region
      %vm138 = vcmask 254976
      %139 = vst.msk [vmem:[#allocation2] sm:$0x3] %vm138, 0.0
      %140 = vst [vmem:[#allocation3] sm:$0x3] -inf
    $region89: #{tpu_custom_call.1} parent=1 // pred_fallthru
      _
    %v141 = vld [vmem:[#allocation5] sm:$0xff]
    %v142 = vld [vmem:[#allocation5 + $0x8] sm:$0xff]
    %v143 = vld [vmem:[#allocation2] sm:$0x3]
    %vm144 = vcmask 261120
    %v145 = vsel %vm144, %v141, 0.0
    %v146 = vrot.slane %v145, 4
    %v147 = vadd.f32 %v145, %v146
    %v148 = vrot.slane %v147, 2
    %v149 = vadd.f32 %v147, %v148
    %v150 = vrot.slane %v149, 1
    %v151 = vadd.f32 %v149, %v150
    %v152 = vsel %vm144, %v142, 0.0
    %v153 = vrot.slane %v152, 4
    %v154 = vadd.f32 %v152, %v153
    %v155 = vrot.slane %v154, 2
    %v156 = vadd.f32 %v154, %v155
    %v157 = vrot.slane %v156, 1
    %v158 = vadd.f32 %v156, %v157
    %vm161 = vcmask 1041409
    %v162 = vsel %vm161, %v158, %v151
    %v164 = vadd.f32 %v143, %v162
    %vm165 = vcmask 254976
    %166 = vst.msk [vmem:[#allocation2] sm:$0x3] %vm165, %v164
    %v167 = vpack.c.bf16 %v141, %v141
    %v168 = vpack.c.bf16 %v142, %v142
    %v169 = vld [vmem:[#allocation9] sm:$0xf]
    %v170 = vld [vmem:[#allocation9 + $0x4] sm:$0xf]
    %v171 = vld [vmem:[#allocation9 + $0x8] sm:$0xf]
    %v172 = vld [vmem:[#allocation9 + $0xc] sm:$0xf]
    %v175 = vunpack.c.l.b16 %v167
    %v176 = vunpack.c.l.b16 %v168
    %v177 = vpack.c.b16 %v176, %v175
    %v182 = vunpack.c.l.b16 %v169
    %v183 = vunpack.c.l.b16 %v170
    %v184 = vunpack.c.l.b16 %v171
    %v185 = vunpack.c.l.b16 %v172
    %v186 = vpack.c.b16 %v183, %v182
    %v187 = vpack.c.b16 %v185, %v184
    %v191 = vsel %vm144, %v177, 0
    %193 = vmatpush.bf16.msra.mxu0 0
    %194 = vmatpush.bf16.msra.mxu0 0
    %195 = vmatpush.bf16.msra.mxu0 0
    %196 = vmatpush.bf16.msra.mxu0 0
    %197 = vmatpush.bf16.msra.mxu0 0
    %198 = vmatpush.bf16.msra.mxu0 0
    %199 = vmatpush.bf16.msra.mxu0 %v187
    %200 = vmatpush.bf16.msra.mxu0 %v186
    %201 = vmatmul.bf16.gmra.mxu0 %v191
    %v202 = vpop.f32.mrf.mxu0
    %v203 = vadd.f32 0.0, %v202
    %v204 = vpop.f32.mrf.mxu0
    %v205 = vadd.f32 0.0, %v204
    %206 = vdwg.mxu0
    %v207 = vrot.slane %v203, 4
    %v208 = vmax.f32 %v203, %v207
    %v209 = vrot.slane %v208, 2
    %v210 = vmax.f32 %v208, %v209
    %v211 = vrot.slane %v210, 1
    %v212 = vmax.f32 %v210, %v211
    %v213 = vrot.slane %v205, 4
    %v214 = vmax.f32 %v205, %v213
    %v215 = vrot.slane %v214, 2
    %v216 = vmax.f32 %v214, %v215
    %v217 = vrot.slane %v216, 1
    %v218 = vmax.f32 %v216, %v217
    %v219 = vld [vmem:[#allocation3] sm:$0x3]
    %v222 = vsel %vm161, %v218, %v212
    %v224 = vmax.f32 %v219, %v222
    %225 = vst [vmem:[#allocation3] sm:$0x3] %v224
    // Predicated region
    $region90: #{tpu_custom_call.1} parent=1 // pred_check
      %p226 = pneg %p134
    $region91: #{tpu_custom_call.1} parent=1 // pred_check_branch
      %228 = sbr.rel (%p226) target = $region93
    $region92: #{tpu_custom_call.1} parent=1 // pred_region
      %v229 = vld [vmem:[#allocation2] sm:$0x3]
      %v230 = vmul.f32 %v229, 0.125
      %v231 = vld [vmem:[#allocation7] sm:$0xff]
      %v232 = vld [vmem:[#allocation7 + $0x8] sm:$0xff]
      %v233 = vld [vmem:[#allocation7 + $0x10] sm:$0xff]
      %v234 = vld [vmem:[#allocation7 + $0x18] sm:$0xff]
      %v235 = vld [vmem:[%s5] sm:$0x1]
      %v237 = vperm.slane %v235, 0
      %v240 = vsel %vm144, %v230, 0
      %242 = vmatpush.msra.mxu0 0.0
      %243 = vmatpush.msra.mxu0 0.0
      %244 = vmatpush.msra.mxu0 0.0
      %245 = vmatpush.msra.mxu0 0.0
      %246 = vmatpush.msra.mxu0 0.0
      %247 = vmatpush.msra.mxu0 0.0
      %248 = vmatpush.msra.mxu0 0.0
      %249 = vmatpush.msra.mxu0 0.0
      %250 = vmatpush.msra.mxu0 0.0
      %251 = vmatpush.msra.mxu0 0.0
      %252 = vmatpush.msra.mxu0 0.0
      %253 = vmatpush.msra.mxu0 0.0
      %254 = vmatpush.msra.mxu0 %v234
      %255 = vmatpush.msra.mxu0 %v233
      %256 = vmatpush.msra.mxu0 %v232
      %257 = vmatpush.msra.mxu0 %v231
      %258 = vmatmul.f32.gmra.mxu0 %v240
      %v259 = vpop.f32.mrf.mxu0
      %v260 = vadd.f32 %v237, %v259
      %261 = vdwg.mxu0
      %v262 = vld [vmem:[#allocation10] sm:$0xff]
      %v263 = vld [vmem:[#allocation10 + $0x8] sm:$0xff]
      %v264 = vld [vmem:[#allocation10 + $0x10] sm:$0xff]
      %v265 = vld [vmem:[#allocation10 + $0x18] sm:$0xff]
      %v266 = vld [vmem:[%s7] sm:$0x1]
      %v268 = vperm.slane %v266, 0
      %270 = vmatpush.msra.mxu0 0.0
      %271 = vmatpush.msra.mxu0 0.0
      %272 = vmatpush.msra.mxu0 0.0
      %273 = vmatpush.msra.mxu0 0.0
      %274 = vmatpush.msra.mxu0 0.0
      %275 = vmatpush.msra.mxu0 0.0
      %276 = vmatpush.msra.mxu0 0.0
      %277 = vmatpush.msra.mxu0 0.0
      %278 = vmatpush.msra.mxu0 0.0
      %279 = vmatpush.msra.mxu0 0.0
      %280 = vmatpush.msra.mxu0 0.0
      %281 = vmatpush.msra.mxu0 0.0
      %282 = vmatpush.msra.mxu0 %v265
      %283 = vmatpush.msra.mxu0 %v264
      %284 = vmatpush.msra.mxu0 %v263
      %285 = vmatpush.msra.mxu0 %v262
      %286 = vmatmul.f32.gmra.mxu0 %v240
      %v287 = vpop.f32.mrf.mxu0
      %v288 = vadd.f32 %v268, %v287
      %289 = vdwg.mxu0
      %v290 = vld [vmem:[#allocation3] sm:$0x3]
      %v291 = vld [vmem:[%s6] sm:$0x1]
      %v293 = vperm.slane %v291, 0
      %v295 = vadd.f32 %v290, %v293
      %v296 = vadd.f32 %v295, %v260
      %v297 = vld [vmem:[%s1] sm:$0x3]
      %v298 = vpack.c.bf16 %v288, %v288
      %v299 = vld [vmem:[%s8] sm:$0xf]
      %v300 = vld [vmem:[%s8 + $0x4] sm:$0xf]
      %v301 = vld [vmem:[%s8 + $0x8] sm:$0xf]
      %v302 = vld [vmem:[%s8 + $0xc] sm:$0xf]
      %v303 = vld [vmem:[%s8 + $0x10] sm:$0xf]
      %v304 = vld [vmem:[%s8 + $0x14] sm:$0xf]
      %v305 = vld [vmem:[%s8 + $0x18] sm:$0xf]
      %v306 = vld [vmem:[%s8 + $0x1c] sm:$0xf]
      %v307 = vld [vmem:[%s8 + $0x20] sm:$0xf]
      %v308 = vld [vmem:[%s8 + $0x24] sm:$0xf]
      %v309 = vld [vmem:[%s8 + $0x28] sm:$0xf]
      %v310 = vld [vmem:[%s8 + $0x2c] sm:$0xf]
      %v311 = vld [vmem:[%s8 + $0x30] sm:$0xf]
      %v312 = vld [vmem:[%s8 + $0x34] sm:$0xf]
      %v313 = vld [vmem:[%s8 + $0x38] sm:$0xf]
      %v314 = vld [vmem:[%s8 + $0x3c] sm:$0xf]
      %v315 = vpack.c.bf16 %v296, %v296
      %v316 = vld [vmem:[%s9] sm:$0xf]
      %v317 = vld [vmem:[%s9 + $0x4] sm:$0xf]
      %v318 = vld [vmem:[%s9 + $0x8] sm:$0xf]
      %v319 = vld [vmem:[%s9 + $0xc] sm:$0xf]
      %v320 = vld [vmem:[%s9 + $0x10] sm:$0xf]
      %v321 = vld [vmem:[%s9 + $0x14] sm:$0xf]
      %v322 = vld [vmem:[%s9 + $0x18] sm:$0xf]
      %v323 = vld [vmem:[%s9 + $0x1c] sm:$0xf]
      %v324 = vld [vmem:[%s9 + $0x20] sm:$0xf]
      %v325 = vld [vmem:[%s9 + $0x24] sm:$0xf]
      %v326 = vld [vmem:[%s9 + $0x28] sm:$0xf]
      %v327 = vld [vmem:[%s9 + $0x2c] sm:$0xf]
      %v328 = vld [vmem:[%s9 + $0x30] sm:$0xf]
      %v329 = vld [vmem:[%s9 + $0x34] sm:$0xf]
      %v330 = vld [vmem:[%s9 + $0x38] sm:$0xf]
      %v331 = vld [vmem:[%s9 + $0x3c] sm:$0xf]
      %v348 = vunpack.c.l.b16 %v316
      %v349 = vunpack.c.l.b16 %v317
      %v350 = vunpack.c.l.b16 %v318
      %v351 = vunpack.c.l.b16 %v319
      %v352 = vunpack.c.l.b16 %v320
      %v353 = vunpack.c.l.b16 %v321
      %v354 = vunpack.c.l.b16 %v322
      %v355 = vunpack.c.l.b16 %v323
      %v356 = vunpack.c.l.b16 %v324
      %v357 = vunpack.c.l.b16 %v325
      %v358 = vunpack.c.l.b16 %v326
      %v359 = vunpack.c.l.b16 %v327
      %v360 = vunpack.c.l.b16 %v328
      %v361 = vunpack.c.l.b16 %v329
      %v362 = vunpack.c.l.b16 %v330
      %v363 = vunpack.c.l.b16 %v331
      %v364 = vpack.c.b16 %v349, %v348
      %v365 = vpack.c.b16 %v351, %v350
      %v366 = vpack.c.b16 %v353, %v352
      %v367 = vpack.c.b16 %v355, %v354
      %v368 = vpack.c.b16 %v357, %v356
      %v369 = vpack.c.b16 %v359, %v358
      %v370 = vpack.c.b16 %v361, %v360
      %v371 = vpack.c.b16 %v363, %v362
      %380 = vmatpush.bf16.msra.mxu0 %v371
      %381 = vmatpush.bf16.msra.mxu0 %v370
      %382 = vmatpush.bf16.msra.mxu0 %v369
      %383 = vmatpush.bf16.msra.mxu0 %v368
      %384 = vmatpush.bf16.msra.mxu0 %v367
      %385 = vmatpush.bf16.msra.mxu0 %v366
      %386 = vmatpush.bf16.msra.mxu0 %v365
      %387 = vmatpush.bf16.msra.mxu0 %v364
      %388 = vmatmul.bf16.gmra.mxu0 %v315
      %v389 = vpop.f32.mrf.mxu0
      %v390 = vadd.f32 0.0, %v389
      %v391 = vpop.f32.mrf.mxu0
      %392 = vdwg.mxu0
      %v409 = vunpack.c.l.b16 %v299
      %v410 = vunpack.c.l.b16 %v300
      %v411 = vunpack.c.l.b16 %v301
      %v412 = vunpack.c.l.b16 %v302
      %v413 = vunpack.c.l.b16 %v303
      %v414 = vunpack.c.l.b16 %v304
      %v415 = vunpack.c.l.b16 %v305
      %v416 = vunpack.c.l.b16 %v306
      %v417 = vunpack.c.l.b16 %v307
      %v418 = vunpack.c.l.b16 %v308
      %v419 = vunpack.c.l.b16 %v309
      %v420 = vunpack.c.l.b16 %v310
      %v421 = vunpack.c.l.b16 %v311
      %v422 = vunpack.c.l.b16 %v312
      %v423 = vunpack.c.l.b16 %v313
      %v424 = vunpack.c.l.b16 %v314
      %v425 = vpack.c.b16 %v410, %v409
      %v426 = vpack.c.b16 %v412, %v411
      %v427 = vpack.c.b16 %v414, %v413
      %v428 = vpack.c.b16 %v416, %v415
      %v429 = vpack.c.b16 %v418, %v417
      %v430 = vpack.c.b16 %v420, %v419
      %v431 = vpack.c.b16 %v422, %v421
      %v432 = vpack.c.b16 %v424, %v423
      %441 = vmatpush.bf16.msra.mxu0 %v432
      %442 = vmatpush.bf16.msra.mxu0 %v431
      %443 = vmatpush.bf16.msra.mxu0 %v430
      %444 = vmatpush.bf16.msra.mxu0 %v429
      %445 = vmatpush.bf16.msra.mxu0 %v428
      %446 = vmatpush.bf16.msra.mxu0 %v427
      %447 = vmatpush.bf16.msra.mxu0 %v426
      %448 = vmatpush.bf16.msra.mxu0 %v425
      %449 = vmatmul.bf16.gmra.mxu0 %v298
      %v450 = vpop.f32.mrf.mxu0
      %v451 = vadd.f32 %v390, %v450
      %v452 = vpop.f32.mrf.mxu0
      %453 = vdwg.mxu0
      %v454 = vld [vmem:[%s10] sm:$0x1]
      %456 = vset.pattern.permute.xlu0 0
      %457 = vperm.xlu0 %456, %v297
      %v458 = vpop.permute.xlu0 %457
      %v461 = vperm.slane %v454, 0
      %v463 = vmul.f32 %v458, %v461
      %v464 = vadd.f32 %v451, %v463
      %v465 = vld [vmem:[%s11] sm:$0x1]
      %v467 = vperm.slane %v465, 0
      %v469 = vadd.f32 %v464, %v467
      %v470 = vmax.f32 %v469, 0.0
      %v471 = vpack.c.bf16 %v470, %v470
      %v472 = vld [vmem:[#allocation12] sm:$0xf]
      %v473 = vld [vmem:[#allocation12 + $0x4] sm:$0xf]
      %v474 = vld [vmem:[#allocation12 + $0x8] sm:$0xf]
      %v475 = vld [vmem:[#allocation12 + $0xc] sm:$0xf]
      %v476 = vld [vmem:[#allocation12 + $0x10] sm:$0xf]
      %v477 = vld [vmem:[#allocation12 + $0x14] sm:$0xf]
      %v478 = vld [vmem:[#allocation12 + $0x18] sm:$0xf]
      %v479 = vld [vmem:[#allocation12 + $0x1c] sm:$0xf]
      %v480 = vld [vmem:[#allocation12 + $0x20] sm:$0xf]
      %v481 = vld [vmem:[#allocation12 + $0x24] sm:$0xf]
      %v482 = vld [vmem:[#allocation12 + $0x28] sm:$0xf]
      %v483 = vld [vmem:[#allocation12 + $0x2c] sm:$0xf]
      %v484 = vld [vmem:[#allocation12 + $0x30] sm:$0xf]
      %v485 = vld [vmem:[#allocation12 + $0x34] sm:$0xf]
      %v486 = vld [vmem:[#allocation12 + $0x38] sm:$0xf]
      %v487 = vld [vmem:[#allocation12 + $0x3c] sm:$0xf]
      %v488 = vld [vmem:[%s13] sm:$0x1]
      %v490 = vperm.slane %v488, 0
      %v508 = vunpack.c.l.b16 %v472
      %v509 = vunpack.c.l.b16 %v473
      %v510 = vunpack.c.l.b16 %v474
      %v511 = vunpack.c.l.b16 %v475
      %v512 = vunpack.c.l.b16 %v476
      %v513 = vunpack.c.l.b16 %v477
      %v514 = vunpack.c.l.b16 %v478
      %v515 = vunpack.c.l.b16 %v479
      %v516 = vunpack.c.l.b16 %v480
      %v517 = vunpack.c.l.b16 %v481
      %v518 = vunpack.c.l.b16 %v482
      %v519 = vunpack.c.l.b16 %v483
      %v520 = vunpack.c.l.b16 %v484
      %v521 = vunpack.c.l.b16 %v485
      %v522 = vunpack.c.l.b16 %v486
      %v523 = vunpack.c.l.b16 %v487
      %v524 = vpack.c.b16 %v509, %v508
      %v525 = vpack.c.b16 %v511, %v510
      %v526 = vpack.c.b16 %v513, %v512
      %v527 = vpack.c.b16 %v515, %v514
      %v528 = vpack.c.b16 %v517, %v516
      %v529 = vpack.c.b16 %v519, %v518
      %v530 = vpack.c.b16 %v521, %v520
      %v531 = vpack.c.b16 %v523, %v522
      %540 = vmatpush.bf16.msra.mxu0 %v531
      %541 = vmatpush.bf16.msra.mxu0 %v530
      %542 = vmatpush.bf16.msra.mxu0 %v529
      %543 = vmatpush.bf16.msra.mxu0 %v528
      %544 = vmatpush.bf16.msra.mxu0 %v527
      %545 = vmatpush.bf16.msra.mxu0 %v526
      %546 = vmatpush.bf16.msra.mxu0 %v525
      %547 = vmatpush.bf16.msra.mxu0 %v524
      %548 = vmatmul.bf16.gmra.mxu0 %v471
      %v549 = vpop.f32.mrf.mxu0
      %v550 = vadd.f32 %v490, %v549
      %v551 = vpop.f32.mrf.mxu0
      %552 = vdwg.mxu0
      %v553 = vmax.f32 %v550, 0.0
      %v554 = vld [vmem:[%s14] sm:$0xff]
      %v555 = vld [vmem:[%s14 + $0x8] sm:$0xff]
      %v556 = vld [vmem:[%s14 + $0x10] sm:$0xff]
      %v557 = vld [vmem:[%s14 + $0x18] sm:$0xff]
      %v558 = vld [vmem:[%s14 + $0x20] sm:$0xff]
      %v559 = vld [vmem:[%s14 + $0x28] sm:$0xff]
      %v560 = vld [vmem:[%s14 + $0x30] sm:$0xff]
      %v561 = vld [vmem:[%s14 + $0x38] sm:$0xff]
      %v562 = vld [vmem:[%s14 + $0x40] sm:$0xff]
      %v563 = vld [vmem:[%s14 + $0x48] sm:$0xff]
      %v564 = vld [vmem:[%s14 + $0x50] sm:$0xff]
      %v565 = vld [vmem:[%s14 + $0x58] sm:$0xff]
      %v566 = vld [vmem:[%s14 + $0x60] sm:$0xff]
      %v567 = vld [vmem:[%s14 + $0x68] sm:$0xff]
      %v568 = vld [vmem:[%s14 + $0x70] sm:$0xff]
      %v569 = vld [vmem:[%s14 + $0x78] sm:$0xff]
      %v570 = vld [vmem:[#allocation4] sm:$0x1]
      %v572 = vperm.slane %v570, 0
      %574 = vmatpush.msra.mxu0 %v569
      %575 = vmatpush.msra.mxu0 %v568
      %576 = vmatpush.msra.mxu0 %v567
      %577 = vmatpush.msra.mxu0 %v566
      %578 = vmatpush.msra.mxu0 %v565
      %579 = vmatpush.msra.mxu0 %v564
      %580 = vmatpush.msra.mxu0 %v563
      %581 = vmatpush.msra.mxu0 %v562
      %582 = vmatpush.msra.mxu0 %v561
      %583 = vmatpush.msra.mxu0 %v560
      %584 = vmatpush.msra.mxu0 %v559
      %585 = vmatpush.msra.mxu0 %v558
      %586 = vmatpush.msra.mxu0 %v557
      %587 = vmatpush.msra.mxu0 %v556
      %588 = vmatpush.msra.mxu0 %v555
      %589 = vmatpush.msra.mxu0 %v554
      %590 = vmatmul.f32.gmra.mxu0 %v553
      %v591 = vpop.f32.mrf.mxu0
      %v592 = vadd.f32 %v572, %v591
      %593 = vdwg.mxu0
      %vm594 = vcmask 1024
      %595 = vst.msk [vmem:[%s16] sm:$0x3] %vm594, %v592
    $region93: #{tpu_custom_call.1} parent=1 // pred_fallthru
      _
    // Predicated region
    $region94: #{tpu_custom_call.1} parent=1 // pred_check
      _
    $region95: #{tpu_custom_call.1} parent=1 // pred_check_branch
      %597 = sbr.rel (0) target = $region97
    $region96: #{tpu_custom_call.1} parent=1 // pred_region
      _
    $region97: #{tpu_custom_call.1} parent=1 // pred_fallthru
      _
    // Predicated region
    $region98: #{tpu_custom_call.1} parent=1 // pred_check
      _
    $region99: #{tpu_custom_call.1} parent=1 // pred_check_branch
      %599 = sbr.rel (0) target = $region101
    $region100: #{tpu_custom_call.1} parent=1 // pred_region
      _
    $region101: #{tpu_custom_call.1} parent=1 // pred_fallthru
      _
    %600 = vsyncpa [#allocation6], 1
    %601 = vsyncpa [#allocation8], 1
    %602 = vsyncpa [#allocation11], 1

</llo_original>
